<compile_context>
chip_gen: v7x
topology: tpu7x:2x2x1
jax: 0.10.0
libtpu: 0.0.40
codegen_flags: <defaults>
</compile_context>

<pallas_src>
import functools

import jax
import jax.numpy as jnp
import numpy as np
from jax.experimental import pallas as pl
from jax.experimental.pallas import tpu as pltpu


# ----------------------------------------------------------------------------
# Pallas kernel: folded fc + single GRU step + both 1x1 transposed-conv channel
# mixes + stride-8 lane scatter (lane-dense (outC, 8L) output).
# ----------------------------------------------------------------------------
def ray_decoder_kernel(
    x_ref,        # (B=32, latent)          f32   per-invocation latent
    h0_ref,       # (B=32, H)               f32   per-invocation GRU state
    wb_ref,       # (L+latent+H+16+outC,8L) bf16  [sel | wxg | whg | w1t | w2t]
    cf_ref,       # (2+16+2*outC, 8L)       f32   [bias_i; bias_h; b1; b2; bg]
    out_ref,      # (outC, 8L)              f32
    *, latent, H, out_c,
):
    L = H
    # bf16-slab row offsets (see prepare_ray_decoder_params; sel first keeps every
    # section aligned to a packed-bf16 sublane group).
    sel0 = 0
    wxg0 = L
    whg0 = L + latent
    w1t0 = L + latent + H
    w2t0 = w1t0 + 16

    h0 = h0_ref[...]                                   # (B, H) f32

    # --- fused fc + GRU projections (bf16 on the MXU, f32 accumulation) -------
    gi = jnp.dot(x_ref[...].astype(jnp.bfloat16),
                 wb_ref[wxg0:wxg0 + latent, 0:3 * H],
                 preferred_element_type=jnp.float32) + cf_ref[0:1, 0:3 * H]
    gh = jnp.dot(h0.astype(jnp.bfloat16),
                 wb_ref[whg0:whg0 + H, 0:3 * H],
                 preferred_element_type=jnp.float32) + cf_ref[1:2, 0:3 * H]

    # PyTorch gate order r, z, n; r and z share one (B, 3H) sum.
    s = gi + gh
    r = jax.nn.sigmoid(s[:, 0:H])
    z = jax.nn.sigmoid(s[:, H:2 * H])
    n = jnp.tanh(gi[:, 2 * H:3 * H] + r * gh[:, 2 * H:3 * H])
    h = (1.0 - z) * n + z * h0        # (B=32, H) == unbatched deconv input (C_in, L)

    # --- deconv 1x1 channel mixes at the stride "hit" positions ---------------
    w1t = wb_ref[w1t0:w1t0 + 16, 0:32]                 # (16, 32)   bf16
    w2t = wb_ref[w2t0:w2t0 + out_c, 0:16]              # (outC, 16) bf16
    a1 = jnp.maximum(
        jnp.dot(w1t, h.astype(jnp.bfloat16), preferred_element_type=jnp.float32)
        + cf_ref[2:18, 0:L], 0.0)                      # (16, L)
    d_hit = jax.nn.sigmoid(
        jnp.dot(w2t, a1.astype(jnp.bfloat16), preferred_element_type=jnp.float32)
        + cf_ref[18:18 + out_c, 0:L])                  # (outC, L)

    # --- stride-8 lane scatter via the precomputed 0/1 selection matrix, then
    #     add the ca/cb background (zero at hit lanes). Output lane-dense (outC, 8L).
    sel = wb_ref[sel0:sel0 + L, :]                     # (L, 8L) exact 0/1 bf16
    out_ref[...] = (jnp.dot(d_hit.astype(jnp.bfloat16), sel,
                            preferred_element_type=jnp.float32)
                    + cf_ref[18 + out_c:18 + 2 * out_c, :])


# ----------------------------------------------------------------------------
# One-time parameter preparation: fc algebraically folded into the GRU input
# projection; all weights / biases / the selection matrix / the ca-cb
# background packed into ONE bf16 slab + ONE f32 slab.
# ----------------------------------------------------------------------------
def prepare_ray_decoder_params(p):
    latent = p["wfc"].shape[0]
    H = p["whr"].shape[0]
    out_c = p["w2"].shape[1]
    L = H
    W = 8 * L

    # fc fold:  u @ Wg = (x @ wfc + bfc) @ Wg = x @ (wfc @ Wg) + bfc @ Wg
    wi_cat = jnp.concatenate([p["wir"], p["wiz"], p["win"]], axis=1)      # (R, 3H)
    wxg = p["wfc"] @ wi_cat                                               # (latent, 3H)
    whg = jnp.concatenate([p["whr"], p["whz"], p["whn"]], axis=1)         # (H, 3H)
    bias_i = p["bfc"] @ wi_cat + jnp.concatenate([p["b_ir"], p["b_iz"], p["b_in"]])
    bias_h = jnp.concatenate([p["b_hr"], p["b_hz"], p["b_hn"]])

    w1t = p["w1"].T                                                       # (16, 32)
    w2t = p["w2"].T                                                       # (outC, 16)

    # Stride-8 selection matrix: sel[i, 8i] = 1, exact 0/1 (safe in bf16).
    sel = (jnp.arange(W)[None, :] == 8 * jnp.arange(L)[:, None]).astype(jnp.float32)

    # bf16 slab: [sel | wxg | whg | w1t | w2t], width 8L, 16-row aligned sections.
    rows = L + latent + H + 16 + out_c
    wb = jnp.zeros((rows, W), jnp.float32)
    r = 0
    wb = wb.at[r:r + L, :].set(sel);                   r += L
    wb = wb.at[r:r + latent, 0:3 * H].set(wxg);        r += latent
    wb = wb.at[r:r + H, 0:3 * H].set(whg);             r += H
    wb = wb.at[r:r + 16, 0:32].set(w1t);               r += 16
    wb = wb.at[r:r + out_c, 0:16].set(w2t)
    wb = wb.astype(jnp.bfloat16)

    # ConvTranspose "miss" constants at their final positions:
    #   k % 8 == 0             -> hit (filled by kernel; background = 0)
    #   k % 4 == 0, k % 8 != 0 -> ca = sigmoid(w2.T relu(b1) + b2)
    #   otherwise              -> cb = sigmoid(b2)
    ca = jax.nn.sigmoid(w2t @ jnp.maximum(p["b1"], 0.0) + p["b2"])        # (outC,)
    cb = jax.nn.sigmoid(p["b2"])                                          # (outC,)
    k = jnp.arange(W)
    bg = jnp.where((k % 8 == 0)[None, :], 0.0,
                   jnp.where((k % 4 == 0)[None, :], ca[:, None], cb[:, None]))

    # f32 slab: [bias_i; bias_h; b1 lane-dense; b2 lane-dense; bg], width 8L.
    cf = jnp.zeros((2 + 16 + 2 * out_c, W), jnp.float32)
    cf = cf.at[0, 0:3 * H].set(bias_i)
    cf = cf.at[1, 0:3 * H].set(bias_h)
    cf = cf.at[2:18, 0:L].set(jnp.broadcast_to(p["b1"][:, None], (16, L)))
    cf = cf.at[18:18 + out_c, 0:L].set(jnp.broadcast_to(p["b2"][:, None], (out_c, L)))
    cf = cf.at[18 + out_c:18 + 2 * out_c, :].set(bg)

    return {"latent": latent, "H": H, "out_c": out_c, "w_bf16": wb, "c_f32": cf}


# ----------------------------------------------------------------------------
# Gridded pallas_call: T independent decoder invocations in one launch.
# Weight BlockSpecs return the same block every step -> constants stay
# VMEM-resident; the invocation axis is "parallel" (megacore on v7x).
# ----------------------------------------------------------------------------
def _ray_decoder_call(prep, xs, h0s):
    latent, H, out_c = prep["latent"], prep["H"], prep["out_c"]
    L = H
    T, B = xs.shape[0], xs.shape[1]
    # PyTorch interprets the 2-D deconv input as unbatched (C_in=32, L); any other
    # batch silently mismatches the channel mix, so enforce it here.
    assert B == 32, f"RayDecoder requires batch == 32 (deconv in_channels), got {B}"
    assert xs.shape == (T, B, latent) and h0s.shape == (T, B, H)

    wb, cf = prep["w_bf16"], prep["c_f32"]
    kernel = functools.partial(ray_decoder_kernel, latent=latent, H=H, out_c=out_c)

    flops = T * 2 * (B * latent * 3 * H + B * H * 3 * H          # fused gate matmuls
                     + 16 * 32 * L + out_c * 16 * L              # deconv channel mixes
                     + out_c * L * 8 * L)                        # scatter matmul
    transcendentals = T * (3 * B * H + out_c * L)
    bytes_accessed = int(T * (xs[0].size + h0s[0].size + out_c * 8 * L) * 4
                         + wb.size * 2 + cf.size * 4)

    return pl.pallas_call(
        kernel,
        grid=(T,),
        in_specs=[
            pl.BlockSpec((None, B, latent), lambda t: (t, 0, 0)),
            pl.BlockSpec((None, B, H), lambda t: (t, 0, 0)),
            pl.BlockSpec(wb.shape, lambda t: (0, 0)),     # VMEM-resident constants
            pl.BlockSpec(cf.shape, lambda t: (0, 0)),
        ],
        out_specs=pl.BlockSpec((None, out_c, 8 * L), lambda t: (t, 0, 0)),
        out_shape=jax.ShapeDtypeStruct((T, out_c, 8 * L), jnp.float32),
        compiler_params=pltpu.CompilerParams(dimension_semantics=("parallel",)),
        cost_estimate=pl.CostEstimate(flops=flops,
                                      transcendentals=transcendentals,
                                      bytes_accessed=bytes_accessed),
    )(xs, h0s, wb, cf)


def ray_decoder_forward(prep, x, time_sequence):
    """Single invocation, matching the PyTorch module signature."""
    h0 = time_sequence[0]
    y = _ray_decoder_call(prep, x[None], h0[None])        # (1, outC, 8L) lane-dense
    L = prep["H"]
    # ConvTranspose1d output length is 8L - 7 (not lane-aligned): slice here.
    # TODO(synk): downstream consumers that tolerate 7 padded lanes can read the
    # lane-dense (outC, 8L) buffer directly and skip this copy.
    return y[0, :, : 8 * L - 7]


def ray_decoder_forward_many(prep, xs, h0s):
    """T independent invocations amortized into one gridded pallas_call."""
    y = _ray_decoder_call(prep, xs, h0s)
    L = prep["H"]
    return y[:, :, : 8 * L - 7]


# ----------------------------------------------------------------------------
# Pure-JAX reference (mirrors the PyTorch module, unfolded, f32)
# ----------------------------------------------------------------------------
def reference_forward(params, x, time_sequence):
    p = params
    h0 = time_sequence[0]
    u = x @ p["wfc"] + p["bfc"]
    r = jax.nn.sigmoid(u @ p["wir"] + p["b_ir"] + h0 @ p["whr"] + p["b_hr"])
    z = jax.nn.sigmoid(u @ p["wiz"] + p["b_iz"] + h0 @ p["whz"] + p["b_hz"])
    n = jnp.tanh(u @ p["win"] + p["b_in"] + r * (h0 @ p["whn"] + p["b_hn"]))
    h = (1.0 - z) * n + z * h0                              # (32, L) unbatched (C, L)
    L = h.shape[1]
    y1 = jnp.broadcast_to(p["b1"][:, None], (16, 2 * L - 1))
    y1 = y1.at[:, ::2].set(p["w1"].T @ h + p["b1"][:, None])
    y1 = jnp.maximum(y1, 0.0)
    out_c = p["w2"].shape[1]
    y2 = jnp.broadcast_to(p["b2"][:, None], (out_c, 8 * L - 7))
    y2 = y2.at[:, ::4].set(p["w2"].T @ y1 + p["b2"][:, None])
    return jax.nn.sigmoid(y2)


def init_params(key, latent_dim, recurrent_size, n_flatten, out_channel):
    ks = jax.random.split(key, 20)
    f = lambda k, s: (0.1 * jax.random.normal(k, s)).astype(jnp.float32)
    H, R = n_flatten, recurrent_size
    return {
        "wfc": f(ks[0], (latent_dim, R)), "bfc": f(ks[1], (R,)),
        "wir": f(ks[2], (R, H)), "wiz": f(ks[3], (R, H)), "win": f(ks[4], (R, H)),
        "whr": f(ks[5], (H, H)), "whz": f(ks[6], (H, H)), "whn": f(ks[7], (H, H)),
        "b_ir": f(ks[8], (H,)), "b_iz": f(ks[9], (H,)), "b_in": f(ks[10], (H,)),
        "b_hr": f(ks[11], (H,)), "b_hz": f(ks[12], (H,)), "b_hn": f(ks[13], (H,)),
        "w1": f(ks[14], (32, 16)), "b1": f(ks[15], (16,)),        # ConvTranspose1d(32,16,1)
        "w2": f(ks[16], (16, out_channel)), "b2": f(ks[17], (out_channel,)),
    }


if __name__ == "__main__":
    latent_dim = 32
    recurrent_size = 256
    n_flatten = 64           # GRU hidden size == deconv spatial length L
    out_channel = 4
    B = 32                   # must be 32: the 2-D deconv input is unbatched (C_in=32, L)

    key = jax.random.PRNGKey(0)
    kp, kx, kh = jax.random.split(key, 3)
    params = init_params(kp, latent_dim, recurrent_size, n_flatten, out_channel)
    x = jax.random.normal(kx, (B, latent_dim), dtype=jnp.float32)
    time_sequence = jax.random.normal(kh, (1, B, n_flatten), dtype=jnp.float32)

    prep = prepare_ray_decoder_params(params)          # one-time packing / folding

    # single-invocation path (module-equivalent signature)
    out = jax.block_until_ready(ray_decoder_forward(prep, x, time_sequence))
    ref = jax.block_until_ready(reference_forward(params, x, time_sequence))
    assert out.shape == (out_channel, 8 * n_flatten - 7), out.shape
    np.testing.assert_allclose(np.asarray(out), np.asarray(ref), atol=1e-2, rtol=1e-2)

    # batched-invocation path: T independent decoder calls in one gridded launch
    T = 3
    kxs, khs = jax.random.split(jax.random.PRNGKey(1))
    xs = jax.random.normal(kxs, (T, B, latent_dim), dtype=jnp.float32)
    h0s = jax.random.normal(khs, (T, B, n_flatten), dtype=jnp.float32)
    outs = jax.block_until_ready(ray_decoder_forward_many(prep, xs, h0s))
    assert outs.shape == (T, out_channel, 8 * n_flatten - 7), outs.shape
    for t in range(T):
        ref_t = reference_forward(params, xs[t], h0s[t][None])
        np.testing.assert_allclose(np.asarray(outs[t]), np.asarray(ref_t),
                                   atol=1e-2, rtol=1e-2)

    print("KERNEL_OK")
</pallas_src>

<mosaic_0001>
module attributes {stable_mosaic.version = 11 : i64} {
  func.func @ray_decoder_kernel(%arg0: i32, %arg1: memref<1x32x32xf32, #tpu.memory_space<vmem>>, %arg2: memref<1x32x64xf32, #tpu.memory_space<vmem>>, %arg3: memref<180x512xbf16, #tpu.memory_space<vmem>>, %arg4: memref<26x512xf32, #tpu.memory_space<vmem>>, %arg5: memref<1x4x512xf32, #tpu.memory_space<vmem>>) attributes {dimension_semantics = [#tpu.dimension_semantics<parallel>], iteration_bounds = array<i64: 1>, scalar_prefetch = 0 : i64, scratch_operands = 0 : i64, tpu.core_type = #tpu.core_type<tc>, window_params = [{transform_indices = @transform_0, window_bounds = array<i64: 1, 32, 32>}, {transform_indices = @transform_1, window_bounds = array<i64: 1, 32, 64>}, {pipeline_mode = #tpu.pipeline_mode<synchronous>, transform_indices = @transform_2, window_bounds = array<i64: 180, 512>}, {pipeline_mode = #tpu.pipeline_mode<synchronous>, transform_indices = @transform_3, window_bounds = array<i64: 26, 512>}, {transform_indices = @transform_4, window_bounds = array<i64: 1, 4, 512>}]} {
    %c0 = arith.constant 0 : index
    %c0_0 = arith.constant 0 : index
    %c0_1 = arith.constant 0 : index
    %0 = vector.load %arg2[%c0, %c0_0, %c0_1] : memref<1x32x64xf32, #tpu.memory_space<vmem>>, vector<1x32x64xf32>
    %1 = vector.shape_cast %0 : vector<1x32x64xf32> to vector<32x64xf32>
    %c0_2 = arith.constant 0 : index
    %c0_3 = arith.constant 0 : index
    %c0_4 = arith.constant 0 : index
    %2 = vector.load %arg1[%c0_2, %c0_3, %c0_4] : memref<1x32x32xf32, #tpu.memory_space<vmem>>, vector<1x32x32xf32>
    %3 = vector.shape_cast %2 : vector<1x32x32xf32> to vector<32x32xf32>
    %4 = arith.truncf %3 : vector<32x32xf32> to vector<32x32xbf16>
    %c64 = arith.constant 64 : index
    %c0_5 = arith.constant 0 : index
    %5 = vector.load %arg3[%c64, %c0_5] : memref<180x512xbf16, #tpu.memory_space<vmem>>, vector<32x192xbf16>
    %cst = arith.constant dense<0.000000e+00> : vector<32x192xf32>
    %6 = tpu.matmul %4, %5, %cst {dimension_numbers = #tpu.dot_dimension_numbers<[1], [0], [0], [1], [0, 0, 1, 1], [], []>} : vector<32x32xbf16>, vector<32x192xbf16>, vector<32x192xf32> -> vector<32x192xf32>
    %c0_6 = arith.constant 0 : index
    %c0_7 = arith.constant 0 : index
    %7 = vector.load %arg4[%c0_6, %c0_7] : memref<26x512xf32, #tpu.memory_space<vmem>>, vector<1x192xf32>
    %8 = vector.broadcast %7 : vector<1x192xf32> to vector<32x192xf32>
    %9 = arith.addf %6, %8 : vector<32x192xf32>
    %10 = arith.truncf %1 : vector<32x64xf32> to vector<32x64xbf16>
    %c96 = arith.constant 96 : index
    %c0_8 = arith.constant 0 : index
    %11 = vector.load %arg3[%c96, %c0_8] : memref<180x512xbf16, #tpu.memory_space<vmem>>, vector<64x192xbf16>
    %cst_9 = arith.constant dense<0.000000e+00> : vector<32x192xf32>
    %12 = tpu.matmul %10, %11, %cst_9 {dimension_numbers = #tpu.dot_dimension_numbers<[1], [0], [0], [1], [0, 0, 1, 1], [], []>} : vector<32x64xbf16>, vector<64x192xbf16>, vector<32x192xf32> -> vector<32x192xf32>
    %c1 = arith.constant 1 : index
    %c0_10 = arith.constant 0 : index
    %13 = vector.load %arg4[%c1, %c0_10] : memref<26x512xf32, #tpu.memory_space<vmem>>, vector<1x192xf32>
    %14 = vector.broadcast %13 : vector<1x192xf32> to vector<32x192xf32>
    %15 = arith.addf %12, %14 : vector<32x192xf32>
    %16 = arith.addf %9, %15 : vector<32x192xf32>
    %17 = vector.extract_strided_slice %16 {offsets = [0, 0], sizes = [32, 64], strides = [1, 1]} : vector<32x192xf32> to vector<32x64xf32>
    %18 = arith.negf %17 : vector<32x64xf32>
    %19 = math.exp %18 : vector<32x64xf32>
    %cst_11 = arith.constant 1.000000e+00 : f32
    %20 = vector.broadcast %cst_11 : f32 to vector<32x64xf32>
    %21 = arith.addf %20, %19 : vector<32x64xf32>
    %22 = arith.divf %20, %21 : vector<32x64xf32>
    %23 = vector.extract_strided_slice %16 {offsets = [0, 64], sizes = [32, 64], strides = [1, 1]} : vector<32x192xf32> to vector<32x64xf32>
    %24 = arith.negf %23 : vector<32x64xf32>
    %25 = math.exp %24 : vector<32x64xf32>
    %cst_12 = arith.constant 1.000000e+00 : f32
    %26 = vector.broadcast %cst_12 : f32 to vector<32x64xf32>
    %27 = arith.addf %26, %25 : vector<32x64xf32>
    %28 = arith.divf %26, %27 : vector<32x64xf32>
    %29 = vector.extract_strided_slice %9 {offsets = [0, 128], sizes = [32, 64], strides = [1, 1]} : vector<32x192xf32> to vector<32x64xf32>
    %30 = vector.extract_strided_slice %15 {offsets = [0, 128], sizes = [32, 64], strides = [1, 1]} : vector<32x192xf32> to vector<32x64xf32>
    %31 = arith.mulf %22, %30 : vector<32x64xf32>
    %32 = arith.addf %29, %31 : vector<32x64xf32>
    %33 = math.tanh %32 : vector<32x64xf32>
    %cst_13 = arith.constant 1.000000e+00 : f32
    %34 = vector.broadcast %cst_13 : f32 to vector<32x64xf32>
    %35 = arith.subf %34, %28 : vector<32x64xf32>
    %36 = arith.mulf %35, %33 : vector<32x64xf32>
    %37 = arith.mulf %28, %1 : vector<32x64xf32>
    %38 = arith.addf %36, %37 : vector<32x64xf32>
    %c160 = arith.constant 160 : index
    %c0_14 = arith.constant 0 : index
    %39 = vector.load %arg3[%c160, %c0_14] : memref<180x512xbf16, #tpu.memory_space<vmem>>, vector<16x32xbf16>
    %c176 = arith.constant 176 : index
    %c0_15 = arith.constant 0 : index
    %40 = vector.load %arg3[%c176, %c0_15] : memref<180x512xbf16, #tpu.memory_space<vmem>>, vector<4x16xbf16>
    %41 = arith.truncf %38 : vector<32x64xf32> to vector<32x64xbf16>
    %cst_16 = arith.constant dense<0.000000e+00> : vector<16x64xf32>
    %42 = tpu.matmul %39, %41, %cst_16 {dimension_numbers = #tpu.dot_dimension_numbers<[1], [0], [0], [1], [0, 0, 1, 1], [], []>} : vector<16x32xbf16>, vector<32x64xbf16>, vector<16x64xf32> -> vector<16x64xf32>
    %c2 = arith.constant 2 : index
    %c0_17 = arith.constant 0 : index
    %43 = vector.load %arg4[%c2, %c0_17] : memref<26x512xf32, #tpu.memory_space<vmem>>, vector<16x64xf32>
    %44 = arith.addf %42, %43 : vector<16x64xf32>
    %cst_18 = arith.constant 0.000000e+00 : f32
    %45 = vector.broadcast %cst_18 : f32 to vector<16x64xf32>
    %46 = arith.maximumf %44, %45 : vector<16x64xf32>
    %47 = arith.truncf %46 : vector<16x64xf32> to vector<16x64xbf16>
    %cst_19 = arith.constant dense<0.000000e+00> : vector<4x64xf32>
    %48 = tpu.matmul %40, %47, %cst_19 {dimension_numbers = #tpu.dot_dimension_numbers<[1], [0], [0], [1], [0, 0, 1, 1], [], []>} : vector<4x16xbf16>, vector<16x64xbf16>, vector<4x64xf32> -> vector<4x64xf32>
    %c18 = arith.constant 18 : index
    %c0_20 = arith.constant 0 : index
    %49 = vector.load %arg4[%c18, %c0_20] : memref<26x512xf32, #tpu.memory_space<vmem>>, vector<4x64xf32>
    %50 = arith.addf %48, %49 : vector<4x64xf32>
    %51 = arith.negf %50 : vector<4x64xf32>
    %52 = math.exp %51 : vector<4x64xf32>
    %cst_21 = arith.constant 1.000000e+00 : f32
    %53 = vector.broadcast %cst_21 : f32 to vector<4x64xf32>
    %54 = arith.addf %53, %52 : vector<4x64xf32>
    %55 = arith.divf %53, %54 : vector<4x64xf32>
    %c0_22 = arith.constant 0 : index
    %c0_23 = arith.constant 0 : index
    %56 = vector.load %arg3[%c0_22, %c0_23] : memref<180x512xbf16, #tpu.memory_space<vmem>>, vector<64x512xbf16>
    %57 = arith.truncf %55 : vector<4x64xf32> to vector<4x64xbf16>
    %cst_24 = arith.constant dense<0.000000e+00> : vector<4x512xf32>
    %58 = tpu.matmul %57, %56, %cst_24 {dimension_numbers = #tpu.dot_dimension_numbers<[1], [0], [0], [1], [0, 0, 1, 1], [], []>} : vector<4x64xbf16>, vector<64x512xbf16>, vector<4x512xf32> -> vector<4x512xf32>
    %c22 = arith.constant 22 : index
    %c0_25 = arith.constant 0 : index
    %59 = vector.load %arg4[%c22, %c0_25] : memref<26x512xf32, #tpu.memory_space<vmem>>, vector<4x512xf32>
    %60 = arith.addf %58, %59 : vector<4x512xf32>
    %c0_26 = arith.constant 0 : index
    %c0_27 = arith.constant 0 : index
    %c0_28 = arith.constant 0 : index
    %61 = vector.load %arg5[%c0_26, %c0_27, %c0_28] : memref<1x4x512xf32, #tpu.memory_space<vmem>>, vector<1x4x512xf32>
    %62 = vector.shape_cast %61 : vector<1x4x512xf32> to vector<4x512xf32>
    %63 = vector.shape_cast %60 : vector<4x512xf32> to vector<1x4x512xf32>
    tpu.vector_store %arg5[%c0_26, %c0_27, %c0_28], %63 {strides = array<i32>} : memref<1x4x512xf32, #tpu.memory_space<vmem>>, vector<1x4x512xf32>,
    return
  }
  func.func @transform_0(%arg0: i32) -> (i32, i32, i32) {
    %c0_i32 = arith.constant 0 : i32
    %c0_i32_0 = arith.constant 0 : i32
    %c0_i32_1 = arith.constant 0 : i32
    return %arg0, %c0_i32, %c0_i32_0 : i32, i32, i32
  }
  func.func @transform_1(%arg0: i32) -> (i32, i32, i32) {
    %c0_i32 = arith.constant 0 : i32
    %c0_i32_0 = arith.constant 0 : i32
    %c0_i32_1 = arith.constant 0 : i32
    return %arg0, %c0_i32, %c0_i32_0 : i32, i32, i32
  }
  func.func @transform_2(%arg0: i32) -> (i32, i32) {
    %c0_i32 = arith.constant 0 : i32
    %c0_i32_0 = arith.constant 0 : i32
    %c0_i32_1 = arith.constant 0 : i32
    return %c0_i32, %c0_i32_0 : i32, i32
  }
  func.func @transform_3(%arg0: i32) -> (i32, i32) {
    %c0_i32 = arith.constant 0 : i32
    %c0_i32_0 = arith.constant 0 : i32
    %c0_i32_1 = arith.constant 0 : i32
    return %c0_i32, %c0_i32_0 : i32, i32
  }
  func.func @transform_4(%arg0: i32) -> (i32, i32, i32) {
    %c0_i32 = arith.constant 0 : i32
    %c0_i32_0 = arith.constant 0 : i32
    %c0_i32_1 = arith.constant 0 : i32
    return %arg0, %c0_i32, %c0_i32_0 : i32, i32, i32
  }
}

</mosaic_0001>

<llo_original>
// kernel: tpu_custom_call.1
$region0: #{tpu_custom_call.1}
  #allocation0 [shape = 'u32[]', space=smem, size = 0x4, offset = 0x4, fixed_abs, tag = 'smem constant byte address 0x4 - core index']
  #allocation1 [shape = 'u32[144,128]{1,0:T(1,128)}', space=vmem, size = 0x12000, scoped, tag = 'internal scratch']
  %s0 = inlined_call_operand.hbm [shape: f32[1,32,32], index: 0, kind: input, shape index: {}]
  %s1 = inlined_call_operand.hbm [shape: f32[1,32,64], index: 1, kind: input, shape index: {}]
  %s2 = inlined_call_operand.hbm [shape: bf16[180,512], index: 2, kind: input, shape index: {}]
  %s3 = inlined_call_operand.hbm [shape: f32[26,512], index: 3, kind: input, shape index: {}]
  %s4 = inlined_call_operand.hbm [shape: f32[1,4,512], index: 4, kind: output, shape index: {}]
  %s5 = sld [smem:[#allocation0]]
  $region42: #{tpu_custom_call.1} parent=0
    _
  %s7 = ssub.s32 1, %s5
  %s8 = scalar_select 0, %s7, %s5
  $region1: #{tpu_custom_call.1} parent=0
    #allocation2 [shape = 'u8[16384]{0}', space=vmem, size = 0x4000, scoped, tag = 'input window, operand 0, single buffered']
    #allocation3 [shape = 's32[1]{0}', space=sflag, size = 0x4, scoped, tag = 'scoped memory for tpu_custom_call.1']
    #allocation4 [shape = 's32[1]{0}', space=sflag, size = 0x4, scoped, tag = 'scoped memory for tpu_custom_call.1']
    #allocation5 [shape = 'u8[16384]{0}', space=vmem, size = 0x4000, scoped, tag = 'input window, operand 1, single buffered']
    #allocation6 [shape = 's32[1]{0}', space=sflag, size = 0x4, scoped, tag = 'scoped memory for tpu_custom_call.1']
    #allocation7 [shape = 'u8[188416]{0}', space=vmem, size = 0x2e000, scoped, tag = 'input window, operand 2, single buffered']
    #allocation8 [shape = 'u8[65536]{0}', space=vmem, size = 0x10000, scoped, tag = 'input window, operand 3, single buffered']
    #allocation9 [shape = 's32[1]{0}', space=sflag, size = 0x4, scoped, tag = 'scoped memory for tpu_custom_call.1']
    #allocation10 [shape = 'u8[8192]{0}', space=vmem, size = 0x2000, scoped, tag = 'output window, operand 0, single buffered']
    %9 = vsyncpa [#allocation3], 0
    %10 = vsyncpa [#allocation6], 0
    %11 = vsyncpa [#allocation9], 0
    %12 = vsyncpa [#allocation4], 0
    // Predicated region
    $region2: #{tpu_custom_call.1} parent=1 // pred_check
      _
    $region3: #{tpu_custom_call.1} parent=1 // pred_check_branch
      %14 = sbr.rel (0) target = $region5
    $region4: #{tpu_custom_call.1} parent=1 // pred_region
      %s16 = ssub.s32 512, 512
      %17 = vsyncadd [#allocation3], %s16
      %s18 = sshll.u32 [#allocation2], 4
      %s19 = int_to_ptr.vmem [resolvable:$true] %s18
      %24 = dma.hbm_to_vmem [thread:$0]  %s0, 512, %s19, [#allocation3], 128, 128, 8
    $region5: #{tpu_custom_call.1} parent=1 // pred_fallthru
      _
    // Predicated region
    $region6: #{tpu_custom_call.1} parent=1 // pred_check
      _
    $region7: #{tpu_custom_call.1} parent=1 // pred_check_branch
      %26 = sbr.rel (0) target = $region9
    $region8: #{tpu_custom_call.1} parent=1 // pred_region
      %s28 = ssub.s32 512, 512
      %29 = vsyncadd [#allocation6], %s28
      %s30 = sshll.u32 [#allocation5], 4
      %s31 = int_to_ptr.vmem [resolvable:$true] %s30
      %36 = dma.hbm_to_vmem [thread:$0]  %s1, 512, %s31, [#allocation6], 128, 128, 8
    $region9: #{tpu_custom_call.1} parent=1 // pred_fallthru
      _
    // Predicated region
    $region10: #{tpu_custom_call.1} parent=1 // pred_check
      _
    $region11: #{tpu_custom_call.1} parent=1 // pred_check_branch
      %38 = sbr.rel (0) target = $region13
    $region12: #{tpu_custom_call.1} parent=1 // pred_region
      %s40 = ssub.s32 5888, 5888
      %41 = vsyncadd [#allocation6], %s40
      %s42 = sshll.u32 [#allocation7], 4
      %s43 = int_to_ptr.vmem [resolvable:$true] %s42
      %48 = dma.hbm_to_vmem [thread:$0]  %s2, 5888, %s43, [#allocation6], 256, 256, 16
    $region13: #{tpu_custom_call.1} parent=1 // pred_fallthru
      _
    // Predicated region
    $region14: #{tpu_custom_call.1} parent=1 // pred_check
      _
    $region15: #{tpu_custom_call.1} parent=1 // pred_check_branch
      %50 = sbr.rel (0) target = $region17
    $region16: #{tpu_custom_call.1} parent=1 // pred_region
      %s52 = ssub.s32 2048, 2048
      %53 = vsyncadd [#allocation9], %s52
      %s54 = sshll.u32 [#allocation8], 4
      %s55 = int_to_ptr.vmem [resolvable:$true] %s54
      %60 = dma.hbm_to_vmem [thread:$0]  %s3, 2048, %s55, [#allocation9], 512, 512, 32
    $region17: #{tpu_custom_call.1} parent=1 // pred_fallthru
      _
    // Predicated region
    $region18: #{tpu_custom_call.1} parent=1 // pred_check
      _
    $region19: #{tpu_custom_call.1} parent=1 // pred_check_branch
      %62 = sbr.rel (0) target = $region21
    $region20: #{tpu_custom_call.1} parent=1 // pred_region
      %63 = dma.done [#allocation3], 512
    $region21: #{tpu_custom_call.1} parent=1 // pred_fallthru
      _
    // Predicated region
    $region22: #{tpu_custom_call.1} parent=1 // pred_check
      _
    $region23: #{tpu_custom_call.1} parent=1 // pred_check_branch
      %65 = sbr.rel (0) target = $region25
    $region24: #{tpu_custom_call.1} parent=1 // pred_region
      %66 = dma.done [#allocation6], 512
    $region25: #{tpu_custom_call.1} parent=1 // pred_fallthru
      _
    // Predicated region
    $region26: #{tpu_custom_call.1} parent=1 // pred_check
      _
    $region27: #{tpu_custom_call.1} parent=1 // pred_check_branch
      %68 = sbr.rel (0) target = $region29
    $region28: #{tpu_custom_call.1} parent=1 // pred_region
      %69 = dma.done [#allocation6], 5888
    $region29: #{tpu_custom_call.1} parent=1 // pred_fallthru
      _
    // Predicated region
    $region30: #{tpu_custom_call.1} parent=1 // pred_check
      _
    $region31: #{tpu_custom_call.1} parent=1 // pred_check_branch
      %71 = sbr.rel (0) target = $region33
    $region32: #{tpu_custom_call.1} parent=1 // pred_region
      %72 = dma.done [#allocation9], 2048
    $region33: #{tpu_custom_call.1} parent=1 // pred_fallthru
      _
    %v74 = vld [vmem:[#allocation5] sm:$0xff]
    %v75 = vld [vmem:[#allocation5 + $0x8] sm:$0xff]
    %v76 = vld [vmem:[#allocation5 + $0x10] sm:$0xff]
    %v77 = vld [vmem:[#allocation5 + $0x18] sm:$0xff]
    %v78 = vld [vmem:[#allocation2] sm:$0xff]
    %v79 = vld [vmem:[#allocation2 + $0x8] sm:$0xff]
    %v80 = vld [vmem:[#allocation2 + $0x10] sm:$0xff]
    %v81 = vld [vmem:[#allocation2 + $0x18] sm:$0xff]
    %v82 = vpack.c.bf16 %v79, %v78
    %v83 = vpack.c.bf16 %v81, %v80
    %v84 = vld [vmem:[#allocation7 + $0x80] sm:$0xff]
    %v85 = vld [vmem:[#allocation7 + $0x90] sm:$0xff]
    %v86 = vld [vmem:[#allocation7 + $0xa0] sm:$0xff]
    %v87 = vld [vmem:[#allocation7 + $0xb0] sm:$0xff]
    %v88 = vld [vmem:[#allocation8] ss:$8 sm:$0x3]
    %v90 = vlaneseq
    %v91 = vshrl.u32 %v90, 7
    %v92 = vsub.s32 0, %v91
    %v93 = vrot.slane %v88, %v92
    %v94 = vlaneseq
    %v95 = vshrl.u32 %v94, 7
    %v96 = vsub.s32 1, %v95
    %v97 = vrot.slane %v88, %v96
    %v104 = vunpack.c.l.b16 %v84
    %v105 = vunpack.c.h.b16 %v84
    %v106 = vunpack.c.l.b16 %v85
    %v107 = vunpack.c.h.b16 %v85
    %v108 = vunpack.c.l.b16 %v86
    %v109 = vunpack.c.h.b16 %v86
    %v110 = vunpack.c.l.b16 %v87
    %v111 = vunpack.c.h.b16 %v87
    %v112 = vpack.c.b16 %v106, %v104
    %v113 = vpack.c.b16 %v107, %v105
    %v114 = vpack.c.b16 %v110, %v108
    %v115 = vpack.c.b16 %v111, %v109
    %vm120 = vcmask 261120
    %v122 = vsel %vm120, %v82, 0
    %v125 = vsel %vm120, %v83, 0
    %127 = vmatprep.subr.bf16.mxu0 %v113
    %128 = vmatpush1.bf16.msra.mxu0 %v112
    %129 = vmatprep.subr.bf16.mxu0 %v115
    %130 = vmatpush1.bf16.msra.mxu0 %v114
    %131 = vmatprep.subr.bf16.mxu0 0
    %132 = vmatpush1.bf16.msra.mxu0 0
    %133 = vmatprep.subr.bf16.mxu0 0
    %134 = vmatpush1.bf16.msra.mxu0 0
    %135 = vmatprep.subr.bf16.mxu0 0
    %136 = vmatpush1.bf16.msra.mxu0 0
    %137 = vmatprep.subr.bf16.mxu0 0
    %138 = vmatpush1.bf16.msra.mxu0 0
    %139 = vmatprep.subr.bf16.mxu0 0
    %140 = vmatpush1.bf16.msra.mxu0 0
    %141 = vmatprep.subr.bf16.mxu0 0
    %142 = vmatpush1.bf16.msra.mxu0 0
    %143 = vmatprep.subr.bf16.mxu0 0
    %144 = vmatpush1.bf16.msra.mxu0 0
    %145 = vmatprep.subr.bf16.mxu0 0
    %146 = vmatpush1.bf16.msra.mxu0 0
    %147 = vmatprep.subr.bf16.mxu0 0
    %148 = vmatpush1.bf16.msra.mxu0 0
    %149 = vmatprep.subr.bf16.mxu0 0
    %150 = vmatpush1.bf16.msra.mxu0 0
    %151 = vmatprep.subr.bf16.mxu0 0
    %152 = vmatpush1.bf16.msra.mxu0 0
    %153 = vmatprep.subr.bf16.mxu0 0
    %154 = vmatpush1.bf16.msra.mxu0 0
    %155 = vmatprep.subr.bf16.mxu0 0
    %156 = vmatpush1.bf16.msra.mxu0 0
    %157 = vmatprep.subr.bf16.mxu0 0
    %158 = vmatpush1.bf16.msra.mxu0 0
    %159 = vmatprep.mubr.bf16.mxu0 0
    %160 = vmatmul.mubr.bf16.gmra.mrb[0].mxu0 %v122
    %v161 = vpop.f32.mrb[0].mxu0
    %v162 = vadd.f32 %v93, %v161
    %v163 = vpop.f32.mrb[0].mxu0
    %v164 = vadd.f32 %v97, %v163
    %v165 = vpop.f32.mrb[0].mxu0
    %v166 = vadd.f32 %v93, %v165
    %v167 = vpop.f32.mrb[0].mxu0
    %v168 = vadd.f32 %v97, %v167
    %169 = vmatprep.mubr.bf16.mxu0 0
    %170 = vmatmul.mubr.bf16.gmra.mrb[0].mxu0 %v125
    %v171 = vpop.f32.mrb[0].mxu0
    %v172 = vadd.f32 %v93, %v171
    %v173 = vpop.f32.mrb[0].mxu0
    %v174 = vadd.f32 %v97, %v173
    %v175 = vpop.f32.mrb[0].mxu0
    %v176 = vadd.f32 %v93, %v175
    %v177 = vpop.f32.mrb[0].mxu0
    %v178 = vadd.f32 %v97, %v177
    %179 = vdwg.mxu0
    %v180 = vpack.c.bf16 %v75, %v74
    %v181 = vpack.c.bf16 %v77, %v76
    %v182 = vld [vmem:[#allocation7 + $0xc0] sm:$0xff]
    %v183 = vld [vmem:[#allocation7 + $0xd0] sm:$0xff]
    %v184 = vld [vmem:[#allocation7 + $0xe0] sm:$0xff]
    %v185 = vld [vmem:[#allocation7 + $0xf0] sm:$0xff]
    %v186 = vld [vmem:[#allocation7 + $0x100] sm:$0xff]
    %v187 = vld [vmem:[#allocation7 + $0x110] sm:$0xff]
    %v188 = vld [vmem:[#allocation7 + $0x120] sm:$0xff]
    %v189 = vld [vmem:[#allocation7 + $0x130] sm:$0xff]
    %s190 = scalar_lea.vmem [#allocation8], 1
    %v191 = vld [vmem:[%s190] ss:$8 sm:$0x3]
    %v193 = vlaneseq
    %v194 = vshrl.u32 %v193, 7
    %v195 = vsub.s32 0, %v194
    %v196 = vrot.slane %v191, %v195
    %v197 = vlaneseq
    %v198 = vshrl.u32 %v197, 7
    %v199 = vsub.s32 1, %v198
    %v200 = vrot.slane %v191, %v199
    %v211 = vunpack.c.l.b16 %v182
    %v212 = vunpack.c.h.b16 %v182
    %v213 = vunpack.c.l.b16 %v183
    %v214 = vunpack.c.h.b16 %v183
    %v215 = vunpack.c.l.b16 %v184
    %v216 = vunpack.c.h.b16 %v184
    %v217 = vunpack.c.l.b16 %v185
    %v218 = vunpack.c.h.b16 %v185
    %v219 = vunpack.c.l.b16 %v186
    %v220 = vunpack.c.h.b16 %v186
    %v221 = vunpack.c.l.b16 %v187
    %v222 = vunpack.c.h.b16 %v187
    %v223 = vunpack.c.l.b16 %v188
    %v224 = vunpack.c.h.b16 %v188
    %v225 = vunpack.c.l.b16 %v189
    %v226 = vunpack.c.h.b16 %v189
    %v227 = vpack.c.b16 %v213, %v211
    %v228 = vpack.c.b16 %v214, %v212
    %v229 = vpack.c.b16 %v217, %v215
    %v230 = vpack.c.b16 %v218, %v216
    %v231 = vpack.c.b16 %v221, %v219
    %v232 = vpack.c.b16 %v222, %v220
    %v233 = vpack.c.b16 %v225, %v223
    %v234 = vpack.c.b16 %v226, %v224
    %vm243 = vcmask 523264
    %v245 = vsel %vm243, %v180, 0
    %v248 = vsel %vm243, %v181, 0
    %250 = vmatprep.subr.bf16.mxu0 %v228
    %251 = vmatpush1.bf16.msra.mxu0 %v227
    %252 = vmatprep.subr.bf16.mxu0 %v230
    %253 = vmatpush1.bf16.msra.mxu0 %v229
    %254 = vmatprep.subr.bf16.mxu0 %v232
    %255 = vmatpush1.bf16.msra.mxu0 %v231
    %256 = vmatprep.subr.bf16.mxu0 %v234
    %257 = vmatpush1.bf16.msra.mxu0 %v233
    %258 = vmatprep.subr.bf16.mxu0 0
    %259 = vmatpush1.bf16.msra.mxu0 0
    %260 = vmatprep.subr.bf16.mxu0 0
    %261 = vmatpush1.bf16.msra.mxu0 0
    %262 = vmatprep.subr.bf16.mxu0 0
    %263 = vmatpush1.bf16.msra.mxu0 0
    %264 = vmatprep.subr.bf16.mxu0 0
    %265 = vmatpush1.bf16.msra.mxu0 0
    %266 = vmatprep.subr.bf16.mxu0 0
    %267 = vmatpush1.bf16.msra.mxu0 0
    %268 = vmatprep.subr.bf16.mxu0 0
    %269 = vmatpush1.bf16.msra.mxu0 0
    %270 = vmatprep.subr.bf16.mxu0 0
    %271 = vmatpush1.bf16.msra.mxu0 0
    %272 = vmatprep.subr.bf16.mxu0 0
    %273 = vmatpush1.bf16.msra.mxu0 0
    %274 = vmatprep.subr.bf16.mxu0 0
    %275 = vmatpush1.bf16.msra.mxu0 0
    %276 = vmatprep.subr.bf16.mxu0 0
    %277 = vmatpush1.bf16.msra.mxu0 0
    %278 = vmatprep.subr.bf16.mxu0 0
    %279 = vmatpush1.bf16.msra.mxu0 0
    %280 = vmatprep.subr.bf16.mxu0 0
    %281 = vmatpush1.bf16.msra.mxu0 0
    %282 = vmatprep.mubr.bf16.mxu0 0
    %283 = vmatmul.mubr.bf16.gmra.mrb[0].mxu0 %v245
    %v284 = vpop.f32.mrb[0].mxu0
    %v285 = vadd.f32 %v196, %v284
    %v286 = vpop.f32.mrb[0].mxu0
    %v287 = vadd.f32 %v200, %v286
    %v288 = vpop.f32.mrb[0].mxu0
    %v289 = vadd.f32 %v196, %v288
    %v290 = vpop.f32.mrb[0].mxu0
    %v291 = vadd.f32 %v200, %v290
    %292 = vmatprep.mubr.bf16.mxu0 0
    %293 = vmatmul.mubr.bf16.gmra.mrb[0].mxu0 %v248
    %v294 = vpop.f32.mrb[0].mxu0
    %v295 = vadd.f32 %v196, %v294
    %v296 = vpop.f32.mrb[0].mxu0
    %v297 = vadd.f32 %v200, %v296
    %v298 = vpop.f32.mrb[0].mxu0
    %v299 = vadd.f32 %v196, %v298
    %v300 = vpop.f32.mrb[0].mxu0
    %v301 = vadd.f32 %v200, %v300
    %302 = vdwg.mxu0
    %v303 = vadd.f32 %v162, %v285
    %v304 = vadd.f32 %v166, %v289
    %v305 = vadd.f32 %v172, %v295
    %v306 = vadd.f32 %v176, %v299
    %v307 = vxor.u32 %v303, 2147483648
    %v308 = vxor.u32 %v304, 2147483648
    %v309 = vxor.u32 %v305, 2147483648
    %v310 = vxor.u32 %v306, 2147483648
    %v311 = vmul.f32 %v307, 1.442695
    %v312 = vpow.pop %v311
    %v313 = vmul.f32 %v308, 1.442695
    %v314 = vpow.pop %v313
    %v315 = vmul.f32 %v309, 1.442695
    %v316 = vpow.pop %v315
    %v317 = vmul.f32 %v310, 1.442695
    %v318 = vpow.pop %v317
    %v319 = vadd.f32 %v312, 1.0
    %v320 = vadd.f32 %v314, 1.0
    %v321 = vadd.f32 %v316, 1.0
    %v322 = vadd.f32 %v318, 1.0
    %v323 = vrcp.pop %v319
    %v324 = vmul.f32 1.0, %v323
    %v325 = vrcp.pop %v320
    %v326 = vmul.f32 1.0, %v325
    %v327 = vrcp.pop %v321
    %v328 = vmul.f32 1.0, %v327
    %v329 = vrcp.pop %v322
    %v330 = vmul.f32 1.0, %v329
    %v331 = vmul.f32 %v324, %v287
    %v332 = vmul.f32 %v326, %v291
    %v333 = vmul.f32 %v328, %v297
    %v334 = vmul.f32 %v330, %v301
    %v335 = vadd.f32 %v164, %v331
    %v336 = vadd.f32 %v168, %v332
    %v337 = vadd.f32 %v174, %v333
    %v338 = vadd.f32 %v178, %v334
    %v339 = vtanh.pop %v335
    %v340 = vtanh.pop %v336
    %v341 = vtanh.pop %v337
    %v342 = vtanh.pop %v338
    %v343 = vsub.f32 1.0, %v324
    %v344 = vsub.f32 1.0, %v326
    %v345 = vsub.f32 1.0, %v328
    %v346 = vsub.f32 1.0, %v330
    %351 = vrot.lane.b32.xlu0 %v339, 64
    %v352 = vpop.permute.xlu0 %351
    %353 = vrot.lane.b32.xlu0 %v340, 64
    %v354 = vpop.permute.xlu0 %353
    %355 = vrot.lane.b32.xlu0 %v341, 64
    %v356 = vpop.permute.xlu0 %355
    %357 = vrot.lane.b32.xlu0 %v342, 64
    %v358 = vpop.permute.xlu0 %357
    %v363 = vmul.f32 %v343, %v352
    %v364 = vmul.f32 %v344, %v354
    %v365 = vmul.f32 %v345, %v356
    %v366 = vmul.f32 %v346, %v358
    %371 = vrot.lane.b32.xlu0 %v74, 64
    %v372 = vpop.permute.xlu0 %371
    %373 = vrot.lane.b32.xlu0 %v75, 64
    %v374 = vpop.permute.xlu0 %373
    %375 = vrot.lane.b32.xlu0 %v76, 64
    %v376 = vpop.permute.xlu0 %375
    %377 = vrot.lane.b32.xlu0 %v77, 64
    %v378 = vpop.permute.xlu0 %377
    %v383 = vmul.f32 %v324, %v372
    %v384 = vmul.f32 %v326, %v374
    %v385 = vmul.f32 %v328, %v376
    %v386 = vmul.f32 %v330, %v378
    %v387 = vadd.f32 %v363, %v383
    %v388 = vadd.f32 %v364, %v384
    %v389 = vadd.f32 %v365, %v385
    %v390 = vadd.f32 %v366, %v386
    %v391 = vld [vmem:[#allocation7 + $0x140] sm:$0xf]
    %v392 = vld [vmem:[#allocation7 + $0x150] sm:$0xf]
    %v393 = vld [vmem:[#allocation7 + $0x160] sm:$0x3]
    %v394 = vpack.c.bf16 %v388, %v387
    %v395 = vpack.c.bf16 %v390, %v389
    %v396 = vld [vmem:[#allocation8] sm:$0xfc]
    %v397 = vld [vmem:[#allocation8 + $0x20] sm:$0xff]
    %v398 = vld [vmem:[#allocation8 + $0x40] sm:$0x3]
    %v401 = vunpack.c.l.b16 %v391
    %v402 = vunpack.c.l.b16 %v392
    %v403 = vpack.c.b16 %v402, %v401
    %406 = vrot.lane.b32.xlu0 %v394, 64
    %v407 = vpop.permute.xlu0 %406
    %408 = vrot.lane.b32.xlu0 %v395, 64
    %v409 = vpop.permute.xlu0 %408
    %vm415 = vcmask 1045504
    %v416 = vrot.slane %v396, 2
    %v417 = vrot.slane %v397, 2
    %v418 = vsel %vm415, %v416, %v417
    %v419 = vrot.slane %v398, 2
    %v420 = vsel %vm415, %v417, %v419
    %v424 = vsel %vm120, %v403, 0
    %426 = vmatprep.subr.bf16.mxu0 0
    %427 = vmatpush1.bf16.msra.mxu0 %v407
    %428 = vmatprep.subr.bf16.mxu0 0
    %429 = vmatpush1.bf16.msra.mxu0 %v409
    %430 = vmatprep.subr.bf16.mxu0 0
    %431 = vmatpush1.bf16.msra.mxu0 0
    %432 = vmatprep.subr.bf16.mxu0 0
    %433 = vmatpush1.bf16.msra.mxu0 0
    %434 = vmatprep.subr.bf16.mxu0 0
    %435 = vmatpush1.bf16.msra.mxu0 0
    %436 = vmatprep.subr.bf16.mxu0 0
    %437 = vmatpush1.bf16.msra.mxu0 0
    %438 = vmatprep.subr.bf16.mxu0 0
    %439 = vmatpush1.bf16.msra.mxu0 0
    %440 = vmatprep.subr.bf16.mxu0 0
    %441 = vmatpush1.bf16.msra.mxu0 0
    %442 = vmatprep.subr.bf16.mxu0 0
    %443 = vmatpush1.bf16.msra.mxu0 0
    %444 = vmatprep.subr.bf16.mxu0 0
    %445 = vmatpush1.bf16.msra.mxu0 0
    %446 = vmatprep.subr.bf16.mxu0 0
    %447 = vmatpush1.bf16.msra.mxu0 0
    %448 = vmatprep.subr.bf16.mxu0 0
    %449 = vmatpush1.bf16.msra.mxu0 0
    %450 = vmatprep.subr.bf16.mxu0 0
    %451 = vmatpush1.bf16.msra.mxu0 0
    %452 = vmatprep.subr.bf16.mxu0 0
    %453 = vmatpush1.bf16.msra.mxu0 0
    %454 = vmatprep.subr.bf16.mxu0 0
    %455 = vmatpush1.bf16.msra.mxu0 0
    %456 = vmatprep.subr.bf16.mxu0 0
    %457 = vmatpush1.bf16.msra.mxu0 0
    %458 = vmatprep.mubr.bf16.mxu0 0
    %459 = vmatmul.mubr.bf16.gmra.mrb[0].mxu0 %v424
    %v460 = vpop.f32.mrb[0].mxu0
    %v461 = vadd.f32 %v418, %v460
    %v462 = vpop.f32.mrb[0].mxu0
    %v463 = vpop.f32.mrb[0].mxu0
    %v464 = vadd.f32 %v420, %v463
    %v465 = vpop.f32.mrb[0].mxu0
    %466 = vdwg.mxu0
    %v467 = vmax.f32 %v461, 0.0
    %v468 = vmax.f32 %v464, 0.0
    %v469 = vpack.c.bf16 %v468, %v467
    %v470 = vld [vmem:[#allocation8 + $0x40] sm:$0x3c]
    %v472 = vrot.slane %v470, 2
    %vm474 = vcmask 130048
    %v476 = vsel %vm474, %v393, 0
    %478 = vmatprep.subr.bf16.mxu0 0
    %479 = vmatpush1.bf16.msra.mxu0 %v469
    %480 = vmatprep.subr.bf16.mxu0 0
    %481 = vmatpush1.bf16.msra.mxu0 0
    %482 = vmatprep.subr.bf16.mxu0 0
    %483 = vmatpush1.bf16.msra.mxu0 0
    %484 = vmatprep.subr.bf16.mxu0 0
    %485 = vmatpush1.bf16.msra.mxu0 0
    %486 = vmatprep.subr.bf16.mxu0 0
    %487 = vmatpush1.bf16.msra.mxu0 0
    %488 = vmatprep.subr.bf16.mxu0 0
    %489 = vmatpush1.bf16.msra.mxu0 0
    %490 = vmatprep.subr.bf16.mxu0 0
    %491 = vmatpush1.bf16.msra.mxu0 0
    %492 = vmatprep.subr.bf16.mxu0 0
    %493 = vmatpush1.bf16.msra.mxu0 0
    %494 = vmatprep.subr.bf16.mxu0 0
    %495 = vmatpush1.bf16.msra.mxu0 0
    %496 = vmatprep.subr.bf16.mxu0 0
    %497 = vmatpush1.bf16.msra.mxu0 0
    %498 = vmatprep.subr.bf16.mxu0 0
    %499 = vmatpush1.bf16.msra.mxu0 0
    %500 = vmatprep.subr.bf16.mxu0 0
    %501 = vmatpush1.bf16.msra.mxu0 0
    %502 = vmatprep.subr.bf16.mxu0 0
    %503 = vmatpush1.bf16.msra.mxu0 0
    %504 = vmatprep.subr.bf16.mxu0 0
    %505 = vmatpush1.bf16.msra.mxu0 0
    %506 = vmatprep.subr.bf16.mxu0 0
    %507 = vmatpush1.bf16.msra.mxu0 0
    %508 = vmatprep.subr.bf16.mxu0 0
    %509 = vmatpush1.bf16.msra.mxu0 0
    %510 = vmatprep.mubr.bf16.mxu0 0
    %511 = vmatmul.mubr.bf16.gmra.mrb[0].mxu0 %v476
    %v512 = vpop.f32.mrb[0].mxu0
    %v513 = vadd.f32 %v472, %v512
    %v514 = vpop.f32.mrb[0].mxu0
    %v515 = vpop.f32.mrb[0].mxu0
    %v516 = vpop.f32.mrb[0].mxu0
    %517 = vdwg.mxu0
    %v518 = vxor.u32 %v513, 2147483648
    %v519 = vmul.f32 %v518, 1.442695
    %v520 = vpow.pop %v519
    %v521 = vadd.f32 %v520, 1.0
    %v522 = vrcp.pop %v521
    %v523 = vmul.f32 1.0, %v522
    %v524 = vld [vmem:[#allocation7] sm:$0xff]
    %v525 = vld [vmem:[#allocation7 + $0x8] sm:$0xff]
    %v526 = vld [vmem:[#allocation7 + $0x10] sm:$0xff]
    %v527 = vld [vmem:[#allocation7 + $0x18] sm:$0xff]
    %v528 = vld [vmem:[#allocation7 + $0x20] sm:$0xff]
    %v529 = vld [vmem:[#allocation7 + $0x28] sm:$0xff]
    %v530 = vld [vmem:[#allocation7 + $0x30] sm:$0xff]
    %v531 = vld [vmem:[#allocation7 + $0x38] sm:$0xff]
    %v532 = vld [vmem:[#allocation7 + $0x40] sm:$0xff]
    %v533 = vld [vmem:[#allocation7 + $0x48] sm:$0xff]
    %v534 = vld [vmem:[#allocation7 + $0x50] sm:$0xff]
    %v535 = vld [vmem:[#allocation7 + $0x58] sm:$0xff]
    %v536 = vld [vmem:[#allocation7 + $0x60] sm:$0xff]
    %v537 = vld [vmem:[#allocation7 + $0x68] sm:$0xff]
    %v538 = vld [vmem:[#allocation7 + $0x70] sm:$0xff]
    %v539 = vld [vmem:[#allocation7 + $0x78] sm:$0xff]
    %v540 = vpack.c.bf16 %v523, %v523
    %v541 = vld [vmem:[#allocation8 + $0x40] sm:$0xc0]
    %v542 = vld [vmem:[#allocation8 + $0x48] sm:$0xc0]
    %v543 = vld [vmem:[#allocation8 + $0x50] sm:$0xc0]
    %v544 = vld [vmem:[#allocation8 + $0x58] sm:$0xc0]
    %v545 = vld [vmem:[#allocation8 + $0x60] sm:$0x3]
    %v546 = vld [vmem:[#allocation8 + $0x68] sm:$0x3]
    %v547 = vld [vmem:[#allocation8 + $0x70] sm:$0x3]
    %v548 = vld [vmem:[#allocation8 + $0x78] sm:$0x3]
    %v565 = vunpack.c.l.b16 %v524
    %v566 = vunpack.c.h.b16 %v524
    %v567 = vunpack.c.l.b16 %v525
    %v568 = vunpack.c.h.b16 %v525
    %v569 = vunpack.c.l.b16 %v526
    %v570 = vunpack.c.h.b16 %v526
    %v571 = vunpack.c.l.b16 %v527
    %v572 = vunpack.c.h.b16 %v527
    %v573 = vunpack.c.l.b16 %v528
    %v574 = vunpack.c.h.b16 %v528
    %v575 = vunpack.c.l.b16 %v529
    %v576 = vunpack.c.h.b16 %v529
    %v577 = vunpack.c.l.b16 %v530
    %v578 = vunpack.c.h.b16 %v530
    %v579 = vunpack.c.l.b16 %v531
    %v580 = vunpack.c.h.b16 %v531
    %v581 = vunpack.c.l.b16 %v532
    %v582 = vunpack.c.h.b16 %v532
    %v583 = vunpack.c.l.b16 %v533
    %v584 = vunpack.c.h.b16 %v533
    %v585 = vunpack.c.l.b16 %v534
    %v586 = vunpack.c.h.b16 %v534
    %v587 = vunpack.c.l.b16 %v535
    %v588 = vunpack.c.h.b16 %v535
    %v589 = vunpack.c.l.b16 %v536
    %v590 = vunpack.c.h.b16 %v536
    %v591 = vunpack.c.l.b16 %v537
    %v592 = vunpack.c.h.b16 %v537
    %v593 = vunpack.c.l.b16 %v538
    %v594 = vunpack.c.h.b16 %v538
    %v595 = vunpack.c.l.b16 %v539
    %v596 = vunpack.c.h.b16 %v539
    %v597 = vpack.c.b16 %v569, %v565
    %v598 = vpack.c.b16 %v570, %v566
    %v599 = vpack.c.b16 %v571, %v567
    %v600 = vpack.c.b16 %v572, %v568
    %v601 = vpack.c.b16 %v577, %v573
    %v602 = vpack.c.b16 %v578, %v574
    %v603 = vpack.c.b16 %v579, %v575
    %v604 = vpack.c.b16 %v580, %v576
    %v605 = vpack.c.b16 %v585, %v581
    %v606 = vpack.c.b16 %v586, %v582
    %v607 = vpack.c.b16 %v587, %v583
    %v608 = vpack.c.b16 %v588, %v584
    %v609 = vpack.c.b16 %v593, %v589
    %v610 = vpack.c.b16 %v594, %v590
    %v611 = vpack.c.b16 %v595, %v591
    %v612 = vpack.c.b16 %v596, %v592
    %vm637 = vcmask 1041408
    %v638 = vrot.slane %v541, 6
    %v639 = vrot.slane %v545, 6
    %v640 = vsel %vm637, %v638, %v639
    %v641 = vrot.slane %v542, 6
    %v642 = vrot.slane %v546, 6
    %v643 = vsel %vm637, %v641, %v642
    %v644 = vrot.slane %v543, 6
    %v645 = vrot.slane %v547, 6
    %v646 = vsel %vm637, %v644, %v645
    %v647 = vrot.slane %v544, 6
    %v648 = vrot.slane %v548, 6
    %v649 = vsel %vm637, %v647, %v648
    %v655 = vsel %vm243, %v540, 0
    %657 = vmatprep.subr.bf16.mxu0 %v598
    %658 = vmatpush1.bf16.msra.mxu0 %v597
    %659 = vmatprep.subr.bf16.mxu0 %v602
    %660 = vmatpush1.bf16.msra.mxu0 %v601
    %661 = vmatprep.subr.bf16.mxu0 %v606
    %662 = vmatpush1.bf16.msra.mxu0 %v605
    %663 = vmatprep.subr.bf16.mxu0 %v610
    %664 = vmatpush1.bf16.msra.mxu0 %v609
    %665 = vmatprep.subr.bf16.mxu0 0
    %666 = vmatpush1.bf16.msra.mxu0 0
    %667 = vmatprep.subr.bf16.mxu0 0
    %668 = vmatpush1.bf16.msra.mxu0 0
    %669 = vmatprep.subr.bf16.mxu0 0
    %670 = vmatpush1.bf16.msra.mxu0 0
    %671 = vmatprep.subr.bf16.mxu0 0
    %672 = vmatpush1.bf16.msra.mxu0 0
    %673 = vmatprep.subr.bf16.mxu0 0
    %674 = vmatpush1.bf16.msra.mxu0 0
    %675 = vmatprep.subr.bf16.mxu0 0
    %676 = vmatpush1.bf16.msra.mxu0 0
    %677 = vmatprep.subr.bf16.mxu0 0
    %678 = vmatpush1.bf16.msra.mxu0 0
    %679 = vmatprep.subr.bf16.mxu0 0
    %680 = vmatpush1.bf16.msra.mxu0 0
    %681 = vmatprep.subr.bf16.mxu0 0
    %682 = vmatpush1.bf16.msra.mxu0 0
    %683 = vmatprep.subr.bf16.mxu0 0
    %684 = vmatpush1.bf16.msra.mxu0 0
    %685 = vmatprep.subr.bf16.mxu0 0
    %686 = vmatpush1.bf16.msra.mxu0 0
    %687 = vmatprep.subr.bf16.mxu0 0
    %688 = vmatpush1.bf16.msra.mxu0 0
    %689 = vmatprep.mubr.bf16.mxu0 0
    %690 = vmatmul.mubr.bf16.gmra.mrb[0].mxu0 %v655
    %v691 = vpop.f32.mrb[0].mxu0
    %v692 = vadd.f32 %v640, %v691
    %v693 = vpop.f32.mrb[0].mxu0
    %v694 = vadd.f32 %v643, %v693
    %v695 = vpop.f32.mrb[0].mxu0
    %v696 = vpop.f32.mrb[0].mxu0
    %697 = vdwg.mxu0
    %698 = vmatprep.subr.bf16.mxu0 %v600
    %699 = vmatpush1.bf16.msra.mxu0 %v599
    %700 = vmatprep.subr.bf16.mxu0 %v604
    %701 = vmatpush1.bf16.msra.mxu0 %v603
    %702 = vmatprep.subr.bf16.mxu0 %v608
    %703 = vmatpush1.bf16.msra.mxu0 %v607
    %704 = vmatprep.subr.bf16.mxu0 %v612
    %705 = vmatpush1.bf16.msra.mxu0 %v611
    %706 = vmatprep.subr.bf16.mxu0 0
    %707 = vmatpush1.bf16.msra.mxu0 0
    %708 = vmatprep.subr.bf16.mxu0 0
    %709 = vmatpush1.bf16.msra.mxu0 0
    %710 = vmatprep.subr.bf16.mxu0 0
    %711 = vmatpush1.bf16.msra.mxu0 0
    %712 = vmatprep.subr.bf16.mxu0 0
    %713 = vmatpush1.bf16.msra.mxu0 0
    %714 = vmatprep.subr.bf16.mxu0 0
    %715 = vmatpush1.bf16.msra.mxu0 0
    %716 = vmatprep.subr.bf16.mxu0 0
    %717 = vmatpush1.bf16.msra.mxu0 0
    %718 = vmatprep.subr.bf16.mxu0 0
    %719 = vmatpush1.bf16.msra.mxu0 0
    %720 = vmatprep.subr.bf16.mxu0 0
    %721 = vmatpush1.bf16.msra.mxu0 0
    %722 = vmatprep.subr.bf16.mxu0 0
    %723 = vmatpush1.bf16.msra.mxu0 0
    %724 = vmatprep.subr.bf16.mxu0 0
    %725 = vmatpush1.bf16.msra.mxu0 0
    %726 = vmatprep.subr.bf16.mxu0 0
    %727 = vmatpush1.bf16.msra.mxu0 0
    %728 = vmatprep.subr.bf16.mxu0 0
    %729 = vmatpush1.bf16.msra.mxu0 0
    %730 = vmatprep.mubr.bf16.mxu0 0
    %731 = vmatmul.mubr.bf16.gmra.mrb[0].mxu0 %v655
    %v732 = vpop.f32.mrb[0].mxu0
    %v733 = vadd.f32 %v646, %v732
    %v734 = vpop.f32.mrb[0].mxu0
    %v735 = vadd.f32 %v649, %v734
    %v736 = vpop.f32.mrb[0].mxu0
    %v737 = vpop.f32.mrb[0].mxu0
    %738 = vdwg.mxu0
    %v743 = vcombine.low %v692, %v694
    %v744 = vcombine.low %v733, %v735
    %747 = vst [vmem:[#allocation10] sm:$0xff] %v743
    %748 = vst [vmem:[#allocation10 + $0x8] sm:$0xff] %v744
    // Predicated region
    $region34: #{tpu_custom_call.1} parent=1 // pred_check
      _
    $region35: #{tpu_custom_call.1} parent=1 // pred_check_branch
      %750 = sbr.rel (0) target = $region37
    $region36: #{tpu_custom_call.1} parent=1 // pred_region
      %s752 = ssub.s32 256, 256
      %753 = vsyncadd [#allocation4], %s752
      %s755 = sshll.u32 [#allocation10], 4
      %s756 = int_to_ptr.vmem [resolvable:$true] %s755
      %758 = dma.vmem_to_hbm [thread:$0]  %s756, 256, %s4, [#allocation4]
    $region37: #{tpu_custom_call.1} parent=1 // pred_fallthru
      _
    // Predicated region
    $region38: #{tpu_custom_call.1} parent=1 // pred_check
      _
    $region39: #{tpu_custom_call.1} parent=1 // pred_check_branch
      %760 = sbr.rel (0) target = $region41
    $region40: #{tpu_custom_call.1} parent=1 // pred_region
      %761 = dma.done [#allocation4], 256
    $region41: #{tpu_custom_call.1} parent=1 // pred_fallthru
      _
    %762 = vsyncpa [#allocation3], 1
    %763 = vsyncpa [#allocation6], 1
    %764 = vsyncpa [#allocation9], 1
    %765 = vsyncpa [#allocation4], 1

</llo_original>
